<compile_context>
chip_gen: v7x
topology: tpu7x:2x2x1
jax: 0.10.0
libtpu: 0.0.40
codegen_flags: <defaults>
</compile_context>

<pallas_src>
import math

import jax
import jax.numpy as jnp
from jax.experimental import pallas as pl
from jax.experimental.pallas import tpu as pltpu

GAMMA = 2.0
LANES = 128
SUBLANES = 8
DEFAULT_TILE_ROWS = 1024  # 1024*128*4B = 512 KiB/buffer; 2 inputs x 2 bufs = 2 MiB

# Padding values whose focal loss is exactly 0 in f32 (x=200, t=1):
#   base = 200 - 200 + 0 + log1p(exp(-200)) = 0 ; modulator = sigmoid(-200)^2 = 0
_PAD_X = 200.0
_PAD_T = 1.0


def _round_up(x, m):
    return ((x + m - 1) // m) * m


def _focal_loss_kernel(x_ref, t_ref, out_ref):
    tile_rows = x_ref.shape[0]
    x = x_ref[...].astype(jnp.float32)
    t = t_ref[...].astype(jnp.float32)

    neg_x = -x
    abs_x = jnp.abs(x)

    # x - x*t + max(-x,0) + log(exp(-max_val)+exp(-x-max_val))
    #   == x - x*t + max(-x,0) + log1p(exp(-|x|))          (1 exp + 1 log)
    base = x - x * t + jnp.maximum(neg_x, 0.0) + jnp.log1p(jnp.exp(-abs_x))

    # modulator = exp(gamma * logsigmoid(z)) with gamma=2  ->  sigmoid(z)^2
    # computed stably from a single exp(-|z|).             (1 exp + 1 divide)
    # TODO(synk): sigmoid^2 form is specialized to gamma=2; general gamma needs
    # exp(gamma * logsigmoid(z)).
    z = neg_x * (t * 2.0 - 1.0)
    e = jnp.exp(-jnp.abs(z))
    s = jnp.where(z >= 0.0, 1.0, e) / (1.0 + e)  # sigmoid(z)
    loss = (s * s) * base

    # Reduce the tile to one (8,128) vreg with pure VPU adds; the cheap final
    # cross-lane reduction happens in the wrapper.
    partial = loss.reshape(tile_rows // SUBLANES, SUBLANES, LANES).sum(axis=0)
    out_ref[...] = partial.reshape(1, SUBLANES, LANES)


def focal_loss(inp, target, gamma=2.0):
    """Pallas implementation of FocalLoss.forward (kernel specialized to gamma=2)."""
    assert gamma == GAMMA, "kernel compiled for gamma=2"
    if inp.shape != target.shape:
        raise ValueError(
            f"Target size ({target.shape}) must be the same as input size ({inp.shape})"
        )

    n = inp.shape[0]
    spatial = math.prod(inp.shape[2:]) if len(inp.shape) > 2 else 1
    total = math.prod(inp.shape)

    # Choose tiling: rows padded to a multiple of tile_rows (tile_rows % 8 == 0).
    rows_needed = -(-total // LANES)
    tile_rows = min(DEFAULT_TILE_ROWS, _round_up(rows_needed, SUBLANES))
    rows = _round_up(rows_needed, tile_rows)
    padded_total = rows * LANES
    num_blocks = rows // tile_rows

    # Keep native dtype (no wrapper f32 upcast); pad with loss-neutral values.
    x_flat = inp.reshape(-1)
    t_flat = target.reshape(-1)
    pad = padded_total - total
    if pad:
        x_flat = jnp.pad(x_flat, (0, pad), constant_values=_PAD_X)
        t_flat = jnp.pad(t_flat, (0, pad), constant_values=_PAD_T)
    x2d = x_flat.reshape(rows, LANES)
    t2d = t_flat.reshape(rows, LANES)

    in_bytes = x2d.size * x2d.dtype.itemsize + t2d.size * t2d.dtype.itemsize
    out_bytes = num_blocks * SUBLANES * LANES * 4
    cost = pl.CostEstimate(
        flops=15 * padded_total,
        transcendentals=4 * padded_total,
        bytes_accessed=in_bytes + out_bytes,
    )

    partials = pl.pallas_call(
        _focal_loss_kernel,
        out_shape=jax.ShapeDtypeStruct((num_blocks, SUBLANES, LANES), jnp.float32),
        grid=(num_blocks,),
        in_specs=[
            pl.BlockSpec((tile_rows, LANES), lambda i: (i, 0)),
            pl.BlockSpec((tile_rows, LANES), lambda i: (i, 0)),
        ],
        out_specs=pl.BlockSpec((1, SUBLANES, LANES), lambda i: (i, 0, 0)),
        compiler_params=pltpu.CompilerParams(
            dimension_semantics=("parallel",),
            vmem_limit_bytes=32 * 1024 * 1024,
        ),
        cost_estimate=cost,
    )(x2d, t2d)

    # loss.sum(dim=1).mean() == total_sum / (N * H * W)
    return jnp.sum(partials) / jnp.float32(n * spatial)


def _reference(inp, target, gamma=2.0):
    x = inp.astype(jnp.float32)
    t = target.astype(jnp.float32)
    max_val = jnp.maximum(-x, 0.0)
    loss = x - x * t + max_val + jnp.log(jnp.exp(-max_val) + jnp.exp(-x - max_val))
    invprobs = jax.nn.log_sigmoid(-x * (t * 2.0 - 1.0))
    loss = jnp.exp(invprobs * gamma) * loss
    return loss.sum(axis=1).mean()


if __name__ == "__main__":
    key = jax.random.PRNGKey(0)
    k1, k2 = jax.random.split(key)

    # NCHW logits and binary targets, same shape (as required by the module).
    x = jax.random.normal(k1, (2, 4, 16, 16), dtype=jnp.float32)
    tgt = (jax.random.uniform(k2, (2, 4, 16, 16)) > 0.5).astype(jnp.float32)

    out = jax.block_until_ready(focal_loss(x, tgt))
    ref = jax.block_until_ready(_reference(x, tgt))
    assert jnp.allclose(out, ref, rtol=1e-5, atol=1e-5), (out, ref)

    print("KERNEL_OK")
</pallas_src>

<mosaic_0001>
module attributes {stable_mosaic.version = 11 : i64} {
  func.func @_focal_loss_kernel(%arg0: i32, %arg1: memref<16x128xf32, #tpu.memory_space<vmem>>, %arg2: memref<16x128xf32, #tpu.memory_space<vmem>>, %arg3: memref<1x8x128xf32, #tpu.memory_space<vmem>>) attributes {dimension_semantics = [#tpu.dimension_semantics<parallel>], iteration_bounds = array<i64: 1>, scalar_prefetch = 0 : i64, scratch_operands = 0 : i64, tpu.core_type = #tpu.core_type<tc>, window_params = [{transform_indices = @transform_0, window_bounds = array<i64: 16, 128>}, {transform_indices = @transform_1, window_bounds = array<i64: 16, 128>}, {transform_indices = @transform_2, window_bounds = array<i64: 1, 8, 128>}]} {
    %c0 = arith.constant 0 : index
    %c0_0 = arith.constant 0 : index
    %0 = vector.load %arg1[%c0, %c0_0] : memref<16x128xf32, #tpu.memory_space<vmem>>, vector<16x128xf32>
    %c0_1 = arith.constant 0 : index
    %c0_2 = arith.constant 0 : index
    %1 = vector.load %arg2[%c0_1, %c0_2] : memref<16x128xf32, #tpu.memory_space<vmem>>, vector<16x128xf32>
    %cst = arith.constant 0.000000e+00 : f32
    %2 = vector.broadcast %cst : f32 to vector<16x128xf32>
    %3 = arith.subf %2, %0 : vector<16x128xf32>
    %4 = math.absf %0 : vector<16x128xf32>
    %5 = arith.mulf %0, %1 : vector<16x128xf32>
    %6 = arith.subf %0, %5 : vector<16x128xf32>
    %cst_3 = arith.constant 0.000000e+00 : f32
    %7 = vector.broadcast %cst_3 : f32 to vector<16x128xf32>
    %8 = arith.maximumf %3, %7 : vector<16x128xf32>
    %9 = arith.addf %6, %8 : vector<16x128xf32>
    %cst_4 = arith.constant 0.000000e+00 : f32
    %10 = vector.broadcast %cst_4 : f32 to vector<16x128xf32>
    %11 = arith.subf %10, %4 : vector<16x128xf32>
    %12 = math.exp %11 : vector<16x128xf32>
    %13 = math.log1p %12 : vector<16x128xf32>
    %14 = arith.addf %9, %13 : vector<16x128xf32>
    %cst_5 = arith.constant 2.000000e+00 : f32
    %15 = vector.broadcast %cst_5 : f32 to vector<16x128xf32>
    %16 = arith.mulf %1, %15 : vector<16x128xf32>
    %cst_6 = arith.constant 1.000000e+00 : f32
    %17 = vector.broadcast %cst_6 : f32 to vector<16x128xf32>
    %18 = arith.subf %16, %17 : vector<16x128xf32>
    %19 = arith.mulf %3, %18 : vector<16x128xf32>
    %20 = math.absf %19 : vector<16x128xf32>
    %cst_7 = arith.constant 0.000000e+00 : f32
    %21 = vector.broadcast %cst_7 : f32 to vector<16x128xf32>
    %22 = arith.subf %21, %20 : vector<16x128xf32>
    %23 = math.exp %22 : vector<16x128xf32>
    %cst_8 = arith.constant 0.000000e+00 : f32
    %24 = vector.broadcast %cst_8 : f32 to vector<16x128xf32>
    %25 = arith.cmpf oge, %19, %24 : vector<16x128xf32>
    %cst_9 = arith.constant 1.000000e+00 : f32
    %26 = vector.broadcast %cst_9 : f32 to vector<16x128xf32>
    %27 = arith.select %25, %26, %23 : vector<16x128xi1>, vector<16x128xf32>
    %cst_10 = arith.constant 1.000000e+00 : f32
    %28 = vector.broadcast %cst_10 : f32 to vector<16x128xf32>
    %29 = arith.addf %28, %23 : vector<16x128xf32>
    %30 = arith.divf %27, %29 : vector<16x128xf32>
    %31 = arith.mulf %30, %30 : vector<16x128xf32>
    %32 = arith.mulf %31, %14 : vector<16x128xf32>
    %33 = vector.shape_cast %32 : vector<16x128xf32> to vector<2x8x128xf32>
    %cst_11 = arith.constant dense<0.000000e+00> : vector<8x128xf32>
    %34 = vector.multi_reduction <add>, %33, %cst_11 [0] : vector<2x8x128xf32> to vector<8x128xf32>
    %35 = vector.shape_cast %34 : vector<8x128xf32> to vector<1x8x128xf32>
    %c0_12 = arith.constant 0 : index
    %c0_13 = arith.constant 0 : index
    %c0_14 = arith.constant 0 : index
    %36 = vector.load %arg3[%c0_12, %c0_13, %c0_14] : memref<1x8x128xf32, #tpu.memory_space<vmem>>, vector<1x8x128xf32>
    tpu.vector_store %arg3[%c0_12, %c0_13, %c0_14], %35 {strides = array<i32>} : memref<1x8x128xf32, #tpu.memory_space<vmem>>, vector<1x8x128xf32>,
    return
  }
  func.func @transform_0(%arg0: i32) -> (i32, i32) {
    %c0_i32 = arith.constant 0 : i32
    %c0_i32_0 = arith.constant 0 : i32
    return %arg0, %c0_i32 : i32, i32
  }
  func.func @transform_1(%arg0: i32) -> (i32, i32) {
    %c0_i32 = arith.constant 0 : i32
    %c0_i32_0 = arith.constant 0 : i32
    return %arg0, %c0_i32 : i32, i32
  }
  func.func @transform_2(%arg0: i32) -> (i32, i32, i32) {
    %c0_i32 = arith.constant 0 : i32
    %c0_i32_0 = arith.constant 0 : i32
    %c0_i32_1 = arith.constant 0 : i32
    return %arg0, %c0_i32, %c0_i32_0 : i32, i32, i32
  }
}

</mosaic_0001>

<llo_original>
// kernel: tpu_custom_call.1
$region0: #{tpu_custom_call.1}
  #allocation0 [shape = 'u32[]', space=smem, size = 0x4, offset = 0x4, fixed_abs, tag = 'smem constant byte address 0x4 - core index']
  #allocation1 [shape = 'u32[144,128]{1,0:T(1,128)}', space=vmem, size = 0x12000, scoped, tag = 'internal scratch']
  %s0 = inlined_call_operand.hbm [shape: f32[16,128], index: 0, kind: input, shape index: {}]
  %s1 = inlined_call_operand.hbm [shape: f32[16,128], index: 1, kind: input, shape index: {}]
  %s2 = inlined_call_operand.hbm [shape: f32[1,8,128], index: 2, kind: output, shape index: {}]
  %s3 = sld [smem:[#allocation0]]
  $region26: #{tpu_custom_call.1} parent=0
    _
  %s5 = ssub.s32 1, %s3
  %s6 = scalar_select 0, %s5, %s3
  $region1: #{tpu_custom_call.1} parent=0
    #allocation2 [shape = 'u8[8192]{0}', space=vmem, size = 0x2000, scoped, tag = 'input window, operand 0, single buffered']
    #allocation3 [shape = 's32[1]{0}', space=sflag, size = 0x4, scoped, tag = 'scoped memory for tpu_custom_call.1']
    #allocation4 [shape = 's32[1]{0}', space=sflag, size = 0x4, scoped, tag = 'scoped memory for tpu_custom_call.1']
    #allocation5 [shape = 'u8[8192]{0}', space=vmem, size = 0x2000, scoped, tag = 'input window, operand 1, single buffered']
    #allocation6 [shape = 's32[1]{0}', space=sflag, size = 0x4, scoped, tag = 'scoped memory for tpu_custom_call.1']
    #allocation7 [shape = 'u8[4096]{0}', space=vmem, size = 0x1000, scoped, tag = 'output window, operand 0, single buffered']
    %7 = vsyncpa [#allocation3], 0
    %8 = vsyncpa [#allocation6], 0
    %9 = vsyncpa [#allocation4], 0
    // Predicated region
    $region2: #{tpu_custom_call.1} parent=1 // pred_check
      _
    $region3: #{tpu_custom_call.1} parent=1 // pred_check_branch
      %11 = sbr.rel (0) target = $region5
    $region4: #{tpu_custom_call.1} parent=1 // pred_region
      %s13 = ssub.s32 256, 256
      %14 = vsyncadd [#allocation3], %s13
      %s15 = sshll.u32 [#allocation2], 4
      %s16 = int_to_ptr.vmem [resolvable:$true] %s15
      %21 = dma.hbm_to_vmem [thread:$0]  %s0, 256, %s16, [#allocation3], 128, 128, 8
    $region5: #{tpu_custom_call.1} parent=1 // pred_fallthru
      _
    // Predicated region
    $region6: #{tpu_custom_call.1} parent=1 // pred_check
      _
    $region7: #{tpu_custom_call.1} parent=1 // pred_check_branch
      %23 = sbr.rel (0) target = $region9
    $region8: #{tpu_custom_call.1} parent=1 // pred_region
      %s25 = ssub.s32 256, 256
      %26 = vsyncadd [#allocation6], %s25
      %s27 = sshll.u32 [#allocation5], 4
      %s28 = int_to_ptr.vmem [resolvable:$true] %s27
      %33 = dma.hbm_to_vmem [thread:$0]  %s1, 256, %s28, [#allocation6], 128, 128, 8
    $region9: #{tpu_custom_call.1} parent=1 // pred_fallthru
      _
    // Predicated region
    $region10: #{tpu_custom_call.1} parent=1 // pred_check
      _
    $region11: #{tpu_custom_call.1} parent=1 // pred_check_branch
      %35 = sbr.rel (0) target = $region13
    $region12: #{tpu_custom_call.1} parent=1 // pred_region
      %36 = dma.done [#allocation3], 256
    $region13: #{tpu_custom_call.1} parent=1 // pred_fallthru
      _
    // Predicated region
    $region14: #{tpu_custom_call.1} parent=1 // pred_check
      _
    $region15: #{tpu_custom_call.1} parent=1 // pred_check_branch
      %38 = sbr.rel (0) target = $region17
    $region16: #{tpu_custom_call.1} parent=1 // pred_region
      %39 = dma.done [#allocation6], 256
    $region17: #{tpu_custom_call.1} parent=1 // pred_fallthru
      _
    %v40 = vld [vmem:[#allocation2] sm:$0xff]
    %v41 = vld [vmem:[#allocation2 + $0x8] sm:$0xff]
    %v42 = vld [vmem:[#allocation5] sm:$0xff]
    %v43 = vld [vmem:[#allocation5 + $0x8] sm:$0xff]
    %v44 = vsub.f32 0.0, %v40
    %v45 = vsub.f32 0.0, %v41
    %v46 = vand.u32 2147483647, %v40
    %v47 = vand.u32 2147483647, %v41
    %v48 = vmul.f32 %v40, %v42
    %v49 = vmul.f32 %v41, %v43
    %v50 = vsub.f32 %v40, %v48
    %v51 = vsub.f32 %v41, %v49
    %v52 = vmax.f32 %v44, 0.0
    %v53 = vmax.f32 %v45, 0.0
    %v54 = vadd.f32 %v50, %v52
    %v55 = vadd.f32 %v51, %v53
    %v56 = vsub.f32 0.0, %v46
    %v57 = vsub.f32 0.0, %v47
    %v58 = vmul.f32 %v56, 1.442695
    %v59 = vpow.pop %v58
    %v60 = vmul.f32 %v57, 1.442695
    %v61 = vpow.pop %v60
    %v62 = vadd.f32 %v59, 1.0
    %v63 = vlog2.pop %v62
    %v64 = vmul.f32 %v63, 0.6931472
    %v65 = vmul.f32 -0.5, %v59
    %v66 = vadd.f32 %v65, 1.0
    %v67 = vmul.f32 %v66, %v59
    %v68 = vand.u32 2147483647, %v59
    %vm69 = vcmp.lt.f32.partialorder %v68, 0.0004427343
    %v70 = vsel %vm69, %v67, %v64
    %v71 = vadd.f32 %v61, 1.0
    %v72 = vlog2.pop %v71
    %v73 = vmul.f32 %v72, 0.6931472
    %v74 = vmul.f32 -0.5, %v61
    %v75 = vadd.f32 %v74, 1.0
    %v76 = vmul.f32 %v75, %v61
    %v77 = vand.u32 2147483647, %v61
    %vm78 = vcmp.lt.f32.partialorder %v77, 0.0004427343
    %v79 = vsel %vm78, %v76, %v73
    %v80 = vadd.f32 %v54, %v70
    %v81 = vadd.f32 %v55, %v79
    %v82 = vmul.f32 %v42, 2.0
    %v83 = vmul.f32 %v43, 2.0
    %v84 = vsub.f32 %v82, 1.0
    %v85 = vsub.f32 %v83, 1.0
    %v86 = vmul.f32 %v44, %v84
    %v87 = vmul.f32 %v45, %v85
    %v88 = vand.u32 2147483647, %v86
    %v89 = vand.u32 2147483647, %v87
    %v90 = vsub.f32 0.0, %v88
    %v91 = vsub.f32 0.0, %v89
    %v92 = vmul.f32 %v90, 1.442695
    %v93 = vpow.pop %v92
    %v94 = vmul.f32 %v91, 1.442695
    %v95 = vpow.pop %v94
    %vm96 = vcmp.ge.f32.partialorder %v86, 0.0
    %vm97 = vcmp.ge.f32.partialorder %v87, 0.0
    %v98 = vsel %vm96, 1.0, %v93
    %v99 = vsel %vm97, 1.0, %v95
    %v100 = vadd.f32 %v93, 1.0
    %v101 = vadd.f32 %v95, 1.0
    %v102 = vrcp.pop %v100
    %v103 = vmul.f32 %v98, %v102
    %v104 = vrcp.pop %v101
    %v105 = vmul.f32 %v99, %v104
    %v106 = vmul.f32 %v103, %v103
    %v107 = vmul.f32 %v105, %v105
    %v108 = vmul.f32 %v106, %v80
    %v109 = vmul.f32 %v107, %v81
    %v110 = vadd.f32 %v108, %v109
    %111 = vst [vmem:[#allocation7] sm:$0xff] %v110
    // Predicated region
    $region18: #{tpu_custom_call.1} parent=1 // pred_check
      _
    $region19: #{tpu_custom_call.1} parent=1 // pred_check_branch
      %113 = sbr.rel (0) target = $region21
    $region20: #{tpu_custom_call.1} parent=1 // pred_region
      %s115 = ssub.s32 128, 128
      %116 = vsyncadd [#allocation4], %s115
      %s118 = sshll.u32 [#allocation7], 4
      %s119 = int_to_ptr.vmem [resolvable:$true] %s118
      %121 = dma.vmem_to_hbm [thread:$0]  %s119, 128, %s2, [#allocation4]
    $region21: #{tpu_custom_call.1} parent=1 // pred_fallthru
      _
    // Predicated region
    $region22: #{tpu_custom_call.1} parent=1 // pred_check
      _
    $region23: #{tpu_custom_call.1} parent=1 // pred_check_branch
      %123 = sbr.rel (0) target = $region25
    $region24: #{tpu_custom_call.1} parent=1 // pred_region
      %124 = dma.done [#allocation4], 128
    $region25: #{tpu_custom_call.1} parent=1 // pred_fallthru
      _
    %125 = vsyncpa [#allocation3], 1
    %126 = vsyncpa [#allocation6], 1
    %127 = vsyncpa [#allocation4], 1

</llo_original>
